<compile_context>
chip_gen: v7x
topology: tpu7x:2x2x1
jax: 0.10.0
libtpu: 0.0.40
codegen_flags: <defaults>
</compile_context>

<pallas_src>
import functools
import math

import jax
import jax.numpy as jnp
from jax.experimental import pallas as pl
from jax.experimental.pallas import tpu as pltpu


def _round_up(x, m):
    return ((x + m - 1) // m) * m


# --------------------------------------------------------------------------- #
# Pass 1: normalize both halves once, fold sqrt(1/T), pad D -> Dp in-kernel.
# --------------------------------------------------------------------------- #
def _prep_kernel(zi_ref, zj_ref, out_ref, *, scale, eps):
    d = zi_ref.shape[-1]
    d_pad = out_ref.shape[-1]
    for h, ref in enumerate((zi_ref, zj_ref)):
        z = ref[...].astype(jnp.float32)                       # (tp, D)
        sq = jnp.sum(z * z, axis=-1, keepdims=True)            # (tp, 1)
        # torch clamps max(||a||*||b||, eps); we clamp each norm at eps
        # (identical for non-degenerate rows).  rsqrt -> EUP slot.
        zn = z * (jax.lax.rsqrt(jnp.maximum(sq, eps * eps)) * scale)
        if d_pad == d:
            out_ref[h] = zn.astype(out_ref.dtype)
        else:
            out_ref[h] = jnp.zeros(out_ref.shape[1:], out_ref.dtype)
            out_ref[h, :, :d] = zn.astype(out_ref.dtype)


# --------------------------------------------------------------------------- #
# Pass 2: tiled similarity + static-max logsumexp.
# --------------------------------------------------------------------------- #
def _ntxent_kernel(zr_ref, zc_ref, zp_ref, out_ref, l_ref, pos_ref, *,
                   inv_temp, tn, b_real, b_pad, col_resident, exp_dtype):
    i = pl.program_id(0)               # row block      ("parallel")
    j = pl.program_id(1)               # column block   ("arbitrary", innermost)
    tm = zr_ref.shape[0]

    @pl.when(j == 0)
    def _init():
        # Positive logit: row a pairs with row a +/- B_pad; partner rows come
        # in via zp_ref's shifted index_map.  zs carries sqrt(1/T) already, so
        # the dot is cosine / T.
        pos = jnp.sum(zr_ref[...].astype(jnp.float32)
                      * zp_ref[...].astype(jnp.float32),
                      axis=-1, keepdims=True)                  # (tm, 1)
        pos_ref[...] = pos
        # Explicit positive column of the CE logits (it is counted again when
        # it streams by as a regular column, matching the PyTorch module).
        l_ref[...] = jnp.exp(pos - inv_temp)

    if col_resident:
        zc = zc_ref[pl.ds(pl.multiple_of(j * tn, tn), tn), :]  # VMEM-resident
    else:
        zc = zc_ref[...]                                       # streamed block

    # (tm, tn) similarity tile on the MXU; f32 accumulation.
    # TODO(synk): if lowered MLIR shows per-tile vxpose for this (tn, Dp)
    # operand, emit a (Dp, N) pre-transposed copy from pass 1 instead.
    sim = jax.lax.dot_general(zr_ref[...], zc, (((1,), (1,)), ((), ())),
                              preferred_element_type=jnp.float32)

    row0 = i * tm
    col0 = j * tn
    has_row_pad = b_real != b_pad

    def _mask(s):
        gr = row0 + jax.lax.broadcasted_iota(jnp.int32, (tm, tn), 0)
        gc = col0 + jax.lax.broadcasted_iota(jnp.int32, (tm, tn), 1)
        m = gr == gc                                   # self-similarity
        if has_row_pad:                                # padded (zero) columns
            pad_col = jnp.logical_or(
                jnp.logical_and(gc >= b_real, gc < b_pad),
                gc >= b_pad + b_real)
            m = jnp.logical_or(m, pad_col)
        return jnp.where(m, -1e30, s)

    crosses_diag = jnp.logical_and(row0 < col0 + tn, col0 < row0 + tm)
    if has_row_pad:
        touches_pad = jnp.logical_or(
            jnp.logical_and(col0 < b_pad, col0 + tn > b_real),
            col0 + tn > b_pad + b_real)
        needs_mask = jnp.logical_or(crosses_diag, touches_pad)
    else:
        needs_mask = crosses_diag
    sim = jax.lax.cond(needs_mask, _mask, lambda s: s, sim)

    # Static-max logsumexp: every logit <= 1/T, so no running max / rescale.
    expo = sim - inv_temp                              # in [-2/T, 0]
    if jnp.dtype(exp_dtype) == jnp.dtype(jnp.float32):
        p = jnp.exp(expo)
    else:                                              # bf16 EUP (v6e / v7x)
        p = jnp.exp(expo.astype(exp_dtype)).astype(jnp.float32)
    l_ref[...] += jnp.sum(p, axis=-1, keepdims=True)

    @pl.when(j == pl.num_programs(1) - 1)
    def _finalize():
        out_ref[...] = inv_temp + jnp.log(l_ref[...]) - pos_ref[...]


# --------------------------------------------------------------------------- #
# Tile selection helpers
# --------------------------------------------------------------------------- #
def _pick_col_tile(n_pad, cap):
    """Largest multiple of 128 that divides n_pad and is <= cap (>= 128)."""
    tn = max(128, (min(cap, n_pad) // 128) * 128)
    while n_pad % tn:
        tn -= 128
    return tn


def _pick_prep_tile(b_pad, tm, d_in, d_pad, out_itemsize):
    """Pass 1 is mem-bound: use as many rows per step as fit ~8 MiB."""
    bytes_per_row = 2 * (d_in * 4 + d_pad * out_itemsize)
    cap_rows = max(tm, (8 << 20) // max(1, bytes_per_row))
    tp, k = tm, 2
    while tm * k <= min(cap_rows, 1024, b_pad):
        if b_pad % (tm * k) == 0:
            tp = tm * k
        k += 1
    return tp


# --------------------------------------------------------------------------- #
# Wrapper
# --------------------------------------------------------------------------- #
def ntxent_loss(z_i, z_j, temperature, *, eps=1e-8, mxu_dtype=jnp.bfloat16,
                block_rows=256, block_cols=512, exp_dtype=None,
                col_resident=None, vmem_limit_bytes=None):
    assert z_i.ndim == 2 and z_i.shape == z_j.shape
    B, D = z_i.shape
    inv_temp = 1.0 / float(temperature)

    # ---- tile / padding selection -----------------------------------------
    Dp = _round_up(max(D, 128), 128)                       # lane-pad features
    tm = max(128, _round_up(min(block_rows, _round_up(B, 128)), 128))
    B_pad = _round_up(B, tm)                               # pad awkward batches
    N_pad = 2 * B_pad
    tn = _pick_col_tile(N_pad, max(128, block_cols))
    num_row, num_col = N_pad // tm, N_pad // tn            # num_row is even
    half_blocks = B_pad // tm

    if B_pad != B:                                         # only if B % tm != 0
        pad = ((0, B_pad - B), (0, 0))
        z_i = jnp.pad(z_i, pad)
        z_j = jnp.pad(z_j, pad)

    if exp_dtype is None:
        try:
            kind = jax.devices()[0].device_kind.lower()
        except Exception:  # pragma: no cover
            kind = ""
        # bf16 EUP exists on v6e / v7x; keep f32 exp elsewhere (v5e etc.).
        exp_dtype = jnp.bfloat16 if ("v6" in kind or "v7" in kind) else jnp.float32

    itemsize = jnp.dtype(mxu_dtype).itemsize
    if col_resident is None:
        # Keep the whole column operand in VMEM when cheap: zc is then read
        # from HBM once instead of num_row times.  Conservative cap so the
        # double-buffered copy still fits v7x's 64 MiB VMEM.
        col_resident = N_pad * Dp * itemsize <= (6 << 20)

    # ---- pass 1: normalize once, O(N*D), mem-bound -------------------------
    tp = _pick_prep_tile(B_pad, tm, D, Dp, itemsize)
    prep = pl.pallas_call(
        functools.partial(_prep_kernel, scale=math.sqrt(inv_temp),
                          eps=float(eps)),
        out_shape=jax.ShapeDtypeStruct((2, B_pad, Dp), mxu_dtype),
        grid_spec=pltpu.PrefetchScalarGridSpec(
            num_scalar_prefetch=0,
            grid=(B_pad // tp,),
            in_specs=[pl.BlockSpec((tp, D), lambda r: (r, 0)),
                      pl.BlockSpec((tp, D), lambda r: (r, 0))],
            out_specs=pl.BlockSpec((2, tp, Dp), lambda r: (0, r, 0))),
        compiler_params=pltpu.CompilerParams(
            dimension_semantics=("parallel",)),
    )(z_i, z_j)
    zs = prep.reshape(N_pad, Dp)                           # free leading merge

    # ---- pass 2: tiled sim matrix + static-max logsumexp -------------------
    if col_resident:
        zc_spec = pl.BlockSpec((N_pad, Dp), lambda i, j: (0, 0))
    else:
        zc_spec = pl.BlockSpec((tn, Dp), lambda i, j: (j, 0))

    cost = pl.CostEstimate(
        flops=2 * N_pad * N_pad * Dp + 4 * N_pad * N_pad,
        transcendentals=N_pad * N_pad + N_pad,
        bytes_accessed=itemsize * N_pad * Dp
                       * ((1 if col_resident else num_row) + 2) + 4 * N_pad)

    kernel = functools.partial(
        _ntxent_kernel, inv_temp=inv_temp, tn=tn, b_real=B, b_pad=B_pad,
        col_resident=col_resident, exp_dtype=exp_dtype)

    cparams = dict(dimension_semantics=("parallel", "arbitrary"))
    if vmem_limit_bytes is not None:
        cparams["vmem_limit_bytes"] = int(vmem_limit_bytes)

    per_row = pl.pallas_call(
        kernel,
        out_shape=jax.ShapeDtypeStruct((N_pad, 1), jnp.float32),
        grid_spec=pltpu.PrefetchScalarGridSpec(
            num_scalar_prefetch=0,
            grid=(num_row, num_col),
            in_specs=[
                pl.BlockSpec((tm, Dp), lambda i, j: (i, 0)),       # row block
                zc_spec,                                           # columns
                pl.BlockSpec((tm, Dp),                             # partners
                             lambda i, j: ((i + half_blocks) % num_row, 0)),
            ],
            out_specs=pl.BlockSpec((tm, 1), lambda i, j: (i, 0)),
            scratch_shapes=[pltpu.VMEM((tm, 1), jnp.float32),      # sum-exp
                            pltpu.VMEM((tm, 1), jnp.float32)]),    # pos logit
        compiler_params=pltpu.CompilerParams(**cparams),
        cost_estimate=cost,
    )(zs, zs, zs)

    if B_pad == B:
        return jnp.mean(per_row)        # CrossEntropyLoss mean over N = 2B rows
    # Drop padded rows before averaging.
    return (jnp.sum(per_row[:B]) + jnp.sum(per_row[B_pad:B_pad + B])) / (2.0 * B)


# --------------------------------------------------------------------------- #
# Pure-JAX reference mirroring the PyTorch module exactly.
# --------------------------------------------------------------------------- #
def ntxent_loss_ref(z_i, z_j, temperature, eps=1e-8):
    z = jnp.concatenate([z_i, z_j], axis=0).astype(jnp.float32)
    N = z.shape[0]
    B = z_i.shape[0]
    nrm = jnp.linalg.norm(z, axis=-1, keepdims=True)
    sim = (z @ z.T) / jnp.maximum(nrm * nrm.T, eps) / temperature
    pos = jnp.concatenate([jnp.diagonal(sim, B), jnp.diagonal(sim, -B)])[:, None]
    neg = sim[~jnp.eye(N, dtype=bool)].reshape(N, N - 1)
    logits = jnp.concatenate([pos, neg], axis=1)
    return jnp.mean(jax.nn.logsumexp(logits, axis=-1) - logits[:, 0])


if __name__ == "__main__":
    key = jax.random.PRNGKey(0)
    k1, k2, k3, k4, k5, k6 = jax.random.split(key, 6)
    temperature = 0.5

    # Small shapes implied by the module: batch=8, hidden=32.
    z_i = jax.random.normal(k1, (8, 32), dtype=jnp.float32)
    z_j = jax.random.normal(k2, (8, 32), dtype=jnp.float32)
    ref = ntxent_loss_ref(z_i, z_j, temperature)

    # f32 operands / f32 exp / streamed columns, 2 column tiles: exercises the
    # cross-tile accumulation, diagonal masking and pad-column masking.
    loss_f32 = jax.block_until_ready(
        ntxent_loss(z_i, z_j, temperature, mxu_dtype=jnp.float32,
                    exp_dtype=jnp.float32, col_resident=False, block_cols=128))
    assert jnp.allclose(loss_f32, ref, rtol=1e-4, atol=1e-5), (loss_f32, ref)

    # Default production path: bf16 operands, auto exp dtype, resident columns,
    # batch a multiple of the row tile (no padding branch).
    z_i1 = jax.random.normal(k3, (128, 32), dtype=jnp.float32)
    z_j1 = jax.random.normal(k4, (128, 32), dtype=jnp.float32)
    ref1 = ntxent_loss_ref(z_i1, z_j1, temperature)
    loss_bf16 = jax.block_until_ready(ntxent_loss(z_i1, z_j1, temperature))
    assert jnp.allclose(loss_bf16, ref1, rtol=3e-2, atol=3e-2), (loss_bf16, ref1)

    # Awkward batch (not a multiple of 8) + smaller temperature: exercises row
    # padding + static-max logsumexp at larger exponents, resident columns.
    z_i2 = jax.random.normal(k5, (12, 40), dtype=jnp.float32)
    z_j2 = jax.random.normal(k6, (12, 40), dtype=jnp.float32)
    ref2 = ntxent_loss_ref(z_i2, z_j2, 0.1)
    loss2 = jax.block_until_ready(
        ntxent_loss(z_i2, z_j2, 0.1, mxu_dtype=jnp.float32,
                    exp_dtype=jnp.float32, block_cols=128))
    assert jnp.allclose(loss2, ref2, rtol=5e-4, atol=1e-4), (loss2, ref2)

    print("KERNEL_OK")
</pallas_src>

<mosaic_0001>
module attributes {stable_mosaic.version = 11 : i64} {
  func.func @_prep_kernel(%arg0: i32, %arg1: memref<128x32xf32, #tpu.memory_space<vmem>>, %arg2: memref<128x32xf32, #tpu.memory_space<vmem>>, %arg3: memref<2x128x128xf32, #tpu.memory_space<vmem>>) attributes {dimension_semantics = [#tpu.dimension_semantics<parallel>], iteration_bounds = array<i64: 1>, scalar_prefetch = 0 : i64, scratch_operands = 0 : i64, tpu.core_type = #tpu.core_type<tc>, window_params = [{transform_indices = @transform_0, window_bounds = array<i64: 128, 32>}, {transform_indices = @transform_1, window_bounds = array<i64: 128, 32>}, {transform_indices = @transform_2, window_bounds = array<i64: 2, 128, 128>}]} {
    %c0 = arith.constant 0 : index
    %c0_0 = arith.constant 0 : index
    %0 = vector.load %arg1[%c0, %c0_0] : memref<128x32xf32, #tpu.memory_space<vmem>>, vector<128x32xf32>
    %1 = arith.mulf %0, %0 : vector<128x32xf32>
    %cst = arith.constant dense<0.000000e+00> : vector<128xf32>
    %2 = vector.multi_reduction <add>, %1, %cst [1] : vector<128x32xf32> to vector<128xf32>
    %3 = vector.shape_cast %2 : vector<128xf32> to vector<128x1xf32>
    %cst_1 = arith.constant 1.000000e-16 : f32
    %4 = vector.broadcast %cst_1 : f32 to vector<128x1xf32>
    %5 = arith.maximumf %3, %4 : vector<128x1xf32>
    %6 = math.rsqrt %5 : vector<128x1xf32>
    %cst_2 = arith.constant 1.41421354 : f32
    %7 = vector.broadcast %cst_2 : f32 to vector<128x1xf32>
    %8 = arith.mulf %6, %7 : vector<128x1xf32>
    %9 = vector.broadcast %8 : vector<128x1xf32> to vector<128x32xf32>
    %10 = arith.mulf %0, %9 : vector<128x32xf32>
    %cst_3 = arith.constant 0.000000e+00 : f32
    %11 = vector.broadcast %cst_3 : f32 to vector<128x128xf32>
    %c0_4 = arith.constant 0 : index
    %c0_5 = arith.constant 0 : index
    %c0_6 = arith.constant 0 : index
    %12 = vector.load %arg3[%c0_4, %c0_5, %c0_6] : memref<2x128x128xf32, #tpu.memory_space<vmem>>, vector<1x128x128xf32>
    %13 = vector.shape_cast %12 : vector<1x128x128xf32> to vector<128x128xf32>
    %14 = vector.shape_cast %11 : vector<128x128xf32> to vector<1x128x128xf32>
    tpu.vector_store %arg3[%c0_4, %c0_5, %c0_6], %14 {strides = array<i32>} : memref<2x128x128xf32, #tpu.memory_space<vmem>>, vector<1x128x128xf32>,
    %c0_7 = arith.constant 0 : index
    %c0_8 = arith.constant 0 : index
    %c0_9 = arith.constant 0 : index
    %15 = vector.load %arg3[%c0_7, %c0_8, %c0_9] : memref<2x128x128xf32, #tpu.memory_space<vmem>>, vector<1x128x32xf32>
    %16 = vector.shape_cast %15 : vector<1x128x32xf32> to vector<128x32xf32>
    %17 = vector.shape_cast %10 : vector<128x32xf32> to vector<1x128x32xf32>
    tpu.vector_store %arg3[%c0_7, %c0_8, %c0_9], %17 {strides = array<i32>} : memref<2x128x128xf32, #tpu.memory_space<vmem>>, vector<1x128x32xf32>,
    %c0_10 = arith.constant 0 : index
    %c0_11 = arith.constant 0 : index
    %18 = vector.load %arg2[%c0_10, %c0_11] : memref<128x32xf32, #tpu.memory_space<vmem>>, vector<128x32xf32>
    %19 = arith.mulf %18, %18 : vector<128x32xf32>
    %cst_12 = arith.constant dense<0.000000e+00> : vector<128xf32>
    %20 = vector.multi_reduction <add>, %19, %cst_12 [1] : vector<128x32xf32> to vector<128xf32>
    %21 = vector.shape_cast %20 : vector<128xf32> to vector<128x1xf32>
    %cst_13 = arith.constant 1.000000e-16 : f32
    %22 = vector.broadcast %cst_13 : f32 to vector<128x1xf32>
    %23 = arith.maximumf %21, %22 : vector<128x1xf32>
    %24 = math.rsqrt %23 : vector<128x1xf32>
    %cst_14 = arith.constant 1.41421354 : f32
    %25 = vector.broadcast %cst_14 : f32 to vector<128x1xf32>
    %26 = arith.mulf %24, %25 : vector<128x1xf32>
    %27 = vector.broadcast %26 : vector<128x1xf32> to vector<128x32xf32>
    %28 = arith.mulf %18, %27 : vector<128x32xf32>
    %cst_15 = arith.constant 0.000000e+00 : f32
    %29 = vector.broadcast %cst_15 : f32 to vector<128x128xf32>
    %c1 = arith.constant 1 : index
    %c0_16 = arith.constant 0 : index
    %c0_17 = arith.constant 0 : index
    %30 = vector.load %arg3[%c1, %c0_16, %c0_17] : memref<2x128x128xf32, #tpu.memory_space<vmem>>, vector<1x128x128xf32>
    %31 = vector.shape_cast %30 : vector<1x128x128xf32> to vector<128x128xf32>
    %32 = vector.shape_cast %29 : vector<128x128xf32> to vector<1x128x128xf32>
    tpu.vector_store %arg3[%c1, %c0_16, %c0_17], %32 {strides = array<i32>} : memref<2x128x128xf32, #tpu.memory_space<vmem>>, vector<1x128x128xf32>,
    %c1_18 = arith.constant 1 : index
    %c0_19 = arith.constant 0 : index
    %c0_20 = arith.constant 0 : index
    %33 = vector.load %arg3[%c1_18, %c0_19, %c0_20] : memref<2x128x128xf32, #tpu.memory_space<vmem>>, vector<1x128x32xf32>
    %34 = vector.shape_cast %33 : vector<1x128x32xf32> to vector<128x32xf32>
    %35 = vector.shape_cast %28 : vector<128x32xf32> to vector<1x128x32xf32>
    tpu.vector_store %arg3[%c1_18, %c0_19, %c0_20], %35 {strides = array<i32>} : memref<2x128x128xf32, #tpu.memory_space<vmem>>, vector<1x128x32xf32>,
    return
  }
  func.func @transform_0(%arg0: i32) -> (i32, i32) {
    %c0_i32 = arith.constant 0 : i32
    %c0_i32_0 = arith.constant 0 : i32
    return %arg0, %c0_i32 : i32, i32
  }
  func.func @transform_1(%arg0: i32) -> (i32, i32) {
    %c0_i32 = arith.constant 0 : i32
    %c0_i32_0 = arith.constant 0 : i32
    return %arg0, %c0_i32 : i32, i32
  }
  func.func @transform_2(%arg0: i32) -> (i32, i32, i32) {
    %c0_i32 = arith.constant 0 : i32
    %c0_i32_0 = arith.constant 0 : i32
    %c0_i32_1 = arith.constant 0 : i32
    return %c0_i32, %arg0, %c0_i32_0 : i32, i32, i32
  }
}

</mosaic_0001>

<llo_original>
// kernel: tpu_custom_call.1
$region0: #{tpu_custom_call.1}
  #allocation0 [shape = 'u32[]', space=smem, size = 0x4, offset = 0x4, fixed_abs, tag = 'smem constant byte address 0x4 - core index']
  #allocation1 [shape = 'u32[144,128]{1,0:T(1,128)}', space=vmem, size = 0x12000, scoped, tag = 'internal scratch']
  %s0 = inlined_call_operand.vmem [shape: f32[128,32], index: 0, kind: input, shape index: {}]
  %s1 = inlined_call_operand.vmem [shape: f32[128,32], index: 1, kind: input, shape index: {}]
  %s2 = inlined_call_operand.hbm [shape: f32[2,128,128], index: 2, kind: output, shape index: {}]
  %s3 = sld [smem:[#allocation0]]
  $region18: #{tpu_custom_call.1} parent=0
    _
  %s5 = ssub.s32 1, %s3
  %s6 = scalar_select 0, %s5, %s3
  $region1: #{tpu_custom_call.1} parent=0
    #allocation2 [shape = 'u8[131072]{0}', space=vmem, size = 0x20000, scoped, tag = 'output window, operand 0, single buffered']
    #allocation3 [shape = 's32[1]{0}', space=sflag, size = 0x4, scoped, tag = 'scoped memory for tpu_custom_call.1']
    %7 = vsyncpa [#allocation3], 0
    // Predicated region
    $region2: #{tpu_custom_call.1} parent=1 // pred_check
      _
    $region3: #{tpu_custom_call.1} parent=1 // pred_check_branch
      %9 = sbr.rel (0) target = $region5
    $region4: #{tpu_custom_call.1} parent=1 // pred_region
      _
    $region5: #{tpu_custom_call.1} parent=1 // pred_fallthru
      _
    // Predicated region
    $region6: #{tpu_custom_call.1} parent=1 // pred_check
      _
    $region7: #{tpu_custom_call.1} parent=1 // pred_check_branch
      %11 = sbr.rel (0) target = $region9
    $region8: #{tpu_custom_call.1} parent=1 // pred_region
      _
    $region9: #{tpu_custom_call.1} parent=1 // pred_fallthru
      _
    %v12 = vld [vmem:[%s0] sm:$0xff]
    %v13 = vld [vmem:[%s0 + $0x8] sm:$0xff]
    %v14 = vld [vmem:[%s0 + $0x10] sm:$0xff]
    %v15 = vld [vmem:[%s0 + $0x18] sm:$0xff]
    %v16 = vld [vmem:[%s0 + $0x20] sm:$0xff]
    %v17 = vld [vmem:[%s0 + $0x28] sm:$0xff]
    %v18 = vld [vmem:[%s0 + $0x30] sm:$0xff]
    %v19 = vld [vmem:[%s0 + $0x38] sm:$0xff]
    %v20 = vld [vmem:[%s0 + $0x40] sm:$0xff]
    %v21 = vld [vmem:[%s0 + $0x48] sm:$0xff]
    %v22 = vld [vmem:[%s0 + $0x50] sm:$0xff]
    %v23 = vld [vmem:[%s0 + $0x58] sm:$0xff]
    %v24 = vld [vmem:[%s0 + $0x60] sm:$0xff]
    %v25 = vld [vmem:[%s0 + $0x68] sm:$0xff]
    %v26 = vld [vmem:[%s0 + $0x70] sm:$0xff]
    %v27 = vld [vmem:[%s0 + $0x78] sm:$0xff]
    %v28 = vmul.f32 %v12, %v12
    %v29 = vmul.f32 %v13, %v13
    %v30 = vmul.f32 %v14, %v14
    %v31 = vmul.f32 %v15, %v15
    %v32 = vmul.f32 %v16, %v16
    %v33 = vmul.f32 %v17, %v17
    %v34 = vmul.f32 %v18, %v18
    %v35 = vmul.f32 %v19, %v19
    %v36 = vmul.f32 %v20, %v20
    %v37 = vmul.f32 %v21, %v21
    %v38 = vmul.f32 %v22, %v22
    %v39 = vmul.f32 %v23, %v23
    %v40 = vmul.f32 %v24, %v24
    %v41 = vmul.f32 %v25, %v25
    %v42 = vmul.f32 %v26, %v26
    %v43 = vmul.f32 %v27, %v27
    %vm44 = vcmask 261120
    %v45 = vsel %vm44, %v28, 0.0
    %46 = vadd.xlane.f32.xlu0 %v45
    %v47 = vpop.xlane.xlu0 %46
    %v48 = vsel %vm44, %v29, 0.0
    %49 = vadd.xlane.f32.xlu0 %v48
    %v50 = vpop.xlane.xlu0 %49
    %v51 = vsel %vm44, %v30, 0.0
    %52 = vadd.xlane.f32.xlu0 %v51
    %v53 = vpop.xlane.xlu0 %52
    %v54 = vsel %vm44, %v31, 0.0
    %55 = vadd.xlane.f32.xlu0 %v54
    %v56 = vpop.xlane.xlu0 %55
    %v57 = vsel %vm44, %v32, 0.0
    %58 = vadd.xlane.f32.xlu0 %v57
    %v59 = vpop.xlane.xlu0 %58
    %v60 = vsel %vm44, %v33, 0.0
    %61 = vadd.xlane.f32.xlu0 %v60
    %v62 = vpop.xlane.xlu0 %61
    %v63 = vsel %vm44, %v34, 0.0
    %64 = vadd.xlane.f32.xlu0 %v63
    %v65 = vpop.xlane.xlu0 %64
    %v66 = vsel %vm44, %v35, 0.0
    %67 = vadd.xlane.f32.xlu0 %v66
    %v68 = vpop.xlane.xlu0 %67
    %v69 = vsel %vm44, %v36, 0.0
    %70 = vadd.xlane.f32.xlu0 %v69
    %v71 = vpop.xlane.xlu0 %70
    %v72 = vsel %vm44, %v37, 0.0
    %73 = vadd.xlane.f32.xlu0 %v72
    %v74 = vpop.xlane.xlu0 %73
    %v75 = vsel %vm44, %v38, 0.0
    %76 = vadd.xlane.f32.xlu0 %v75
    %v77 = vpop.xlane.xlu0 %76
    %v78 = vsel %vm44, %v39, 0.0
    %79 = vadd.xlane.f32.xlu0 %v78
    %v80 = vpop.xlane.xlu0 %79
    %v81 = vsel %vm44, %v40, 0.0
    %82 = vadd.xlane.f32.xlu0 %v81
    %v83 = vpop.xlane.xlu0 %82
    %v84 = vsel %vm44, %v41, 0.0
    %85 = vadd.xlane.f32.xlu0 %v84
    %v86 = vpop.xlane.xlu0 %85
    %v87 = vsel %vm44, %v42, 0.0
    %88 = vadd.xlane.f32.xlu0 %v87
    %v89 = vpop.xlane.xlu0 %88
    %v90 = vsel %vm44, %v43, 0.0
    %91 = vadd.xlane.f32.xlu0 %v90
    %v92 = vpop.xlane.xlu0 %91
    %v93 = vmax.f32 %v47, 1e-16
    %v94 = vmax.f32 %v50, 1e-16
    %v95 = vmax.f32 %v53, 1e-16
    %v96 = vmax.f32 %v56, 1e-16
    %v97 = vmax.f32 %v59, 1e-16
    %v98 = vmax.f32 %v62, 1e-16
    %v99 = vmax.f32 %v65, 1e-16
    %v100 = vmax.f32 %v68, 1e-16
    %v101 = vmax.f32 %v71, 1e-16
    %v102 = vmax.f32 %v74, 1e-16
    %v103 = vmax.f32 %v77, 1e-16
    %v104 = vmax.f32 %v80, 1e-16
    %v105 = vmax.f32 %v83, 1e-16
    %v106 = vmax.f32 %v86, 1e-16
    %v107 = vmax.f32 %v89, 1e-16
    %v108 = vmax.f32 %v92, 1e-16
    %v109 = vrsqrt.pop %v93
    %v110 = vrsqrt.pop %v94
    %v111 = vrsqrt.pop %v95
    %v112 = vrsqrt.pop %v96
    %v113 = vrsqrt.pop %v97
    %v114 = vrsqrt.pop %v98
    %v115 = vrsqrt.pop %v99
    %v116 = vrsqrt.pop %v100
    %v117 = vrsqrt.pop %v101
    %v118 = vrsqrt.pop %v102
    %v119 = vrsqrt.pop %v103
    %v120 = vrsqrt.pop %v104
    %v121 = vrsqrt.pop %v105
    %v122 = vrsqrt.pop %v106
    %v123 = vrsqrt.pop %v107
    %v124 = vrsqrt.pop %v108
    %v125 = vmul.f32 %v109, 1.4142135
    %v126 = vmul.f32 %v110, 1.4142135
    %v127 = vmul.f32 %v111, 1.4142135
    %v128 = vmul.f32 %v112, 1.4142135
    %v129 = vmul.f32 %v113, 1.4142135
    %v130 = vmul.f32 %v114, 1.4142135
    %v131 = vmul.f32 %v115, 1.4142135
    %v132 = vmul.f32 %v116, 1.4142135
    %v133 = vmul.f32 %v117, 1.4142135
    %v134 = vmul.f32 %v118, 1.4142135
    %v135 = vmul.f32 %v119, 1.4142135
    %v136 = vmul.f32 %v120, 1.4142135
    %v137 = vmul.f32 %v121, 1.4142135
    %v138 = vmul.f32 %v122, 1.4142135
    %v139 = vmul.f32 %v123, 1.4142135
    %v140 = vmul.f32 %v124, 1.4142135
    %v141 = vmul.f32 %v12, %v125
    %v142 = vmul.f32 %v13, %v126
    %v143 = vmul.f32 %v14, %v127
    %v144 = vmul.f32 %v15, %v128
    %v145 = vmul.f32 %v16, %v129
    %v146 = vmul.f32 %v17, %v130
    %v147 = vmul.f32 %v18, %v131
    %v148 = vmul.f32 %v19, %v132
    %v149 = vmul.f32 %v20, %v133
    %v150 = vmul.f32 %v21, %v134
    %v151 = vmul.f32 %v22, %v135
    %v152 = vmul.f32 %v23, %v136
    %v153 = vmul.f32 %v24, %v137
    %v154 = vmul.f32 %v25, %v138
    %v155 = vmul.f32 %v26, %v139
    %v156 = vmul.f32 %v27, %v140
    %157 = vst [vmem:[#allocation2] sm:$0xff] 0.0
    %158 = vst [vmem:[#allocation2 + $0x8] sm:$0xff] 0.0
    %159 = vst [vmem:[#allocation2 + $0x10] sm:$0xff] 0.0
    %160 = vst [vmem:[#allocation2 + $0x18] sm:$0xff] 0.0
    %161 = vst [vmem:[#allocation2 + $0x20] sm:$0xff] 0.0
    %162 = vst [vmem:[#allocation2 + $0x28] sm:$0xff] 0.0
    %163 = vst [vmem:[#allocation2 + $0x30] sm:$0xff] 0.0
    %164 = vst [vmem:[#allocation2 + $0x38] sm:$0xff] 0.0
    %165 = vst [vmem:[#allocation2 + $0x40] sm:$0xff] 0.0
    %166 = vst [vmem:[#allocation2 + $0x48] sm:$0xff] 0.0
    %167 = vst [vmem:[#allocation2 + $0x50] sm:$0xff] 0.0
    %168 = vst [vmem:[#allocation2 + $0x58] sm:$0xff] 0.0
    %169 = vst [vmem:[#allocation2 + $0x60] sm:$0xff] 0.0
    %170 = vst [vmem:[#allocation2 + $0x68] sm:$0xff] 0.0
    %171 = vst [vmem:[#allocation2 + $0x70] sm:$0xff] 0.0
    %172 = vst [vmem:[#allocation2 + $0x78] sm:$0xff] 0.0
    %173 = vst.msk [vmem:[#allocation2] sm:$0xff] %vm44, %v141
    %174 = vst.msk [vmem:[#allocation2 + $0x8] sm:$0xff] %vm44, %v142
    %175 = vst.msk [vmem:[#allocation2 + $0x10] sm:$0xff] %vm44, %v143
    %176 = vst.msk [vmem:[#allocation2 + $0x18] sm:$0xff] %vm44, %v144
    %177 = vst.msk [vmem:[#allocation2 + $0x20] sm:$0xff] %vm44, %v145
    %178 = vst.msk [vmem:[#allocation2 + $0x28] sm:$0xff] %vm44, %v146
    %179 = vst.msk [vmem:[#allocation2 + $0x30] sm:$0xff] %vm44, %v147
    %180 = vst.msk [vmem:[#allocation2 + $0x38] sm:$0xff] %vm44, %v148
    %181 = vst.msk [vmem:[#allocation2 + $0x40] sm:$0xff] %vm44, %v149
    %182 = vst.msk [vmem:[#allocation2 + $0x48] sm:$0xff] %vm44, %v150
    %183 = vst.msk [vmem:[#allocation2 + $0x50] sm:$0xff] %vm44, %v151
    %184 = vst.msk [vmem:[#allocation2 + $0x58] sm:$0xff] %vm44, %v152
    %185 = vst.msk [vmem:[#allocation2 + $0x60] sm:$0xff] %vm44, %v153
    %186 = vst.msk [vmem:[#allocation2 + $0x68] sm:$0xff] %vm44, %v154
    %187 = vst.msk [vmem:[#allocation2 + $0x70] sm:$0xff] %vm44, %v155
    %188 = vst.msk [vmem:[#allocation2 + $0x78] sm:$0xff] %vm44, %v156
    %v189 = vld [vmem:[%s1] sm:$0xff]
    %v190 = vld [vmem:[%s1 + $0x8] sm:$0xff]
    %v191 = vld [vmem:[%s1 + $0x10] sm:$0xff]
    %v192 = vld [vmem:[%s1 + $0x18] sm:$0xff]
    %v193 = vld [vmem:[%s1 + $0x20] sm:$0xff]
    %v194 = vld [vmem:[%s1 + $0x28] sm:$0xff]
    %v195 = vld [vmem:[%s1 + $0x30] sm:$0xff]
    %v196 = vld [vmem:[%s1 + $0x38] sm:$0xff]
    %v197 = vld [vmem:[%s1 + $0x40] sm:$0xff]
    %v198 = vld [vmem:[%s1 + $0x48] sm:$0xff]
    %v199 = vld [vmem:[%s1 + $0x50] sm:$0xff]
    %v200 = vld [vmem:[%s1 + $0x58] sm:$0xff]
    %v201 = vld [vmem:[%s1 + $0x60] sm:$0xff]
    %v202 = vld [vmem:[%s1 + $0x68] sm:$0xff]
    %v203 = vld [vmem:[%s1 + $0x70] sm:$0xff]
    %v204 = vld [vmem:[%s1 + $0x78] sm:$0xff]
    %v205 = vmul.f32 %v189, %v189
    %v206 = vmul.f32 %v190, %v190
    %v207 = vmul.f32 %v191, %v191
    %v208 = vmul.f32 %v192, %v192
    %v209 = vmul.f32 %v193, %v193
    %v210 = vmul.f32 %v194, %v194
    %v211 = vmul.f32 %v195, %v195
    %v212 = vmul.f32 %v196, %v196
    %v213 = vmul.f32 %v197, %v197
    %v214 = vmul.f32 %v198, %v198
    %v215 = vmul.f32 %v199, %v199
    %v216 = vmul.f32 %v200, %v200
    %v217 = vmul.f32 %v201, %v201
    %v218 = vmul.f32 %v202, %v202
    %v219 = vmul.f32 %v203, %v203
    %v220 = vmul.f32 %v204, %v204
    %v221 = vsel %vm44, %v205, 0.0
    %222 = vadd.xlane.f32.xlu0 %v221
    %v223 = vpop.xlane.xlu0 %222
    %v224 = vsel %vm44, %v206, 0.0
    %225 = vadd.xlane.f32.xlu0 %v224
    %v226 = vpop.xlane.xlu0 %225
    %v227 = vsel %vm44, %v207, 0.0
    %228 = vadd.xlane.f32.xlu0 %v227
    %v229 = vpop.xlane.xlu0 %228
    %v230 = vsel %vm44, %v208, 0.0
    %231 = vadd.xlane.f32.xlu0 %v230
    %v232 = vpop.xlane.xlu0 %231
    %v233 = vsel %vm44, %v209, 0.0
    %234 = vadd.xlane.f32.xlu0 %v233
    %v235 = vpop.xlane.xlu0 %234
    %v236 = vsel %vm44, %v210, 0.0
    %237 = vadd.xlane.f32.xlu0 %v236
    %v238 = vpop.xlane.xlu0 %237
    %v239 = vsel %vm44, %v211, 0.0
    %240 = vadd.xlane.f32.xlu0 %v239
    %v241 = vpop.xlane.xlu0 %240
    %v242 = vsel %vm44, %v212, 0.0
    %243 = vadd.xlane.f32.xlu0 %v242
    %v244 = vpop.xlane.xlu0 %243
    %v245 = vsel %vm44, %v213, 0.0
    %246 = vadd.xlane.f32.xlu0 %v245
    %v247 = vpop.xlane.xlu0 %246
    %v248 = vsel %vm44, %v214, 0.0
    %249 = vadd.xlane.f32.xlu0 %v248
    %v250 = vpop.xlane.xlu0 %249
    %v251 = vsel %vm44, %v215, 0.0
    %252 = vadd.xlane.f32.xlu0 %v251
    %v253 = vpop.xlane.xlu0 %252
    %v254 = vsel %vm44, %v216, 0.0
    %255 = vadd.xlane.f32.xlu0 %v254
    %v256 = vpop.xlane.xlu0 %255
    %v257 = vsel %vm44, %v217, 0.0
    %258 = vadd.xlane.f32.xlu0 %v257
    %v259 = vpop.xlane.xlu0 %258
    %v260 = vsel %vm44, %v218, 0.0
    %261 = vadd.xlane.f32.xlu0 %v260
    %v262 = vpop.xlane.xlu0 %261
    %v263 = vsel %vm44, %v219, 0.0
    %264 = vadd.xlane.f32.xlu0 %v263
    %v265 = vpop.xlane.xlu0 %264
    %v266 = vsel %vm44, %v220, 0.0
    %267 = vadd.xlane.f32.xlu0 %v266
    %v268 = vpop.xlane.xlu0 %267
    %v269 = vmax.f32 %v223, 1e-16
    %v270 = vmax.f32 %v226, 1e-16
    %v271 = vmax.f32 %v229, 1e-16
    %v272 = vmax.f32 %v232, 1e-16
    %v273 = vmax.f32 %v235, 1e-16
    %v274 = vmax.f32 %v238, 1e-16
    %v275 = vmax.f32 %v241, 1e-16
    %v276 = vmax.f32 %v244, 1e-16
    %v277 = vmax.f32 %v247, 1e-16
    %v278 = vmax.f32 %v250, 1e-16
    %v279 = vmax.f32 %v253, 1e-16
    %v280 = vmax.f32 %v256, 1e-16
    %v281 = vmax.f32 %v259, 1e-16
    %v282 = vmax.f32 %v262, 1e-16
    %v283 = vmax.f32 %v265, 1e-16
    %v284 = vmax.f32 %v268, 1e-16
    %v285 = vrsqrt.pop %v269
    %v286 = vrsqrt.pop %v270
    %v287 = vrsqrt.pop %v271
    %v288 = vrsqrt.pop %v272
    %v289 = vrsqrt.pop %v273
    %v290 = vrsqrt.pop %v274
    %v291 = vrsqrt.pop %v275
    %v292 = vrsqrt.pop %v276
    %v293 = vrsqrt.pop %v277
    %v294 = vrsqrt.pop %v278
    %v295 = vrsqrt.pop %v279
    %v296 = vrsqrt.pop %v280
    %v297 = vrsqrt.pop %v281
    %v298 = vrsqrt.pop %v282
    %v299 = vrsqrt.pop %v283
    %v300 = vrsqrt.pop %v284
    %v301 = vmul.f32 %v285, 1.4142135
    %v302 = vmul.f32 %v286, 1.4142135
    %v303 = vmul.f32 %v287, 1.4142135
    %v304 = vmul.f32 %v288, 1.4142135
    %v305 = vmul.f32 %v289, 1.4142135
    %v306 = vmul.f32 %v290, 1.4142135
    %v307 = vmul.f32 %v291, 1.4142135
    %v308 = vmul.f32 %v292, 1.4142135
    %v309 = vmul.f32 %v293, 1.4142135
    %v310 = vmul.f32 %v294, 1.4142135
    %v311 = vmul.f32 %v295, 1.4142135
    %v312 = vmul.f32 %v296, 1.4142135
    %v313 = vmul.f32 %v297, 1.4142135
    %v314 = vmul.f32 %v298, 1.4142135
    %v315 = vmul.f32 %v299, 1.4142135
    %v316 = vmul.f32 %v300, 1.4142135
    %v317 = vmul.f32 %v189, %v301
    %v318 = vmul.f32 %v190, %v302
    %v319 = vmul.f32 %v191, %v303
    %v320 = vmul.f32 %v192, %v304
    %v321 = vmul.f32 %v193, %v305
    %v322 = vmul.f32 %v194, %v306
    %v323 = vmul.f32 %v195, %v307
    %v324 = vmul.f32 %v196, %v308
    %v325 = vmul.f32 %v197, %v309
    %v326 = vmul.f32 %v198, %v310
    %v327 = vmul.f32 %v199, %v311
    %v328 = vmul.f32 %v200, %v312
    %v329 = vmul.f32 %v201, %v313
    %v330 = vmul.f32 %v202, %v314
    %v331 = vmul.f32 %v203, %v315
    %v332 = vmul.f32 %v204, %v316
    %s333 = scalar_lea.vmem [#allocation2], 128
    %334 = vst [vmem:[%s333] sm:$0xff] 0.0
    %335 = vst [vmem:[%s333 + $0x8] sm:$0xff] 0.0
    %336 = vst [vmem:[%s333 + $0x10] sm:$0xff] 0.0
    %337 = vst [vmem:[%s333 + $0x18] sm:$0xff] 0.0
    %338 = vst [vmem:[%s333 + $0x20] sm:$0xff] 0.0
    %339 = vst [vmem:[%s333 + $0x28] sm:$0xff] 0.0
    %340 = vst [vmem:[%s333 + $0x30] sm:$0xff] 0.0
    %341 = vst [vmem:[%s333 + $0x38] sm:$0xff] 0.0
    %342 = vst [vmem:[%s333 + $0x40] sm:$0xff] 0.0
    %343 = vst [vmem:[%s333 + $0x48] sm:$0xff] 0.0
    %344 = vst [vmem:[%s333 + $0x50] sm:$0xff] 0.0
    %345 = vst [vmem:[%s333 + $0x58] sm:$0xff] 0.0
    %346 = vst [vmem:[%s333 + $0x60] sm:$0xff] 0.0
    %347 = vst [vmem:[%s333 + $0x68] sm:$0xff] 0.0
    %348 = vst [vmem:[%s333 + $0x70] sm:$0xff] 0.0
    %349 = vst [vmem:[%s333 + $0x78] sm:$0xff] 0.0
    %350 = vst.msk [vmem:[%s333] sm:$0xff] %vm44, %v317
    %351 = vst.msk [vmem:[%s333 + $0x8] sm:$0xff] %vm44, %v318
    %352 = vst.msk [vmem:[%s333 + $0x10] sm:$0xff] %vm44, %v319
    %353 = vst.msk [vmem:[%s333 + $0x18] sm:$0xff] %vm44, %v320
    %354 = vst.msk [vmem:[%s333 + $0x20] sm:$0xff] %vm44, %v321
    %355 = vst.msk [vmem:[%s333 + $0x28] sm:$0xff] %vm44, %v322
    %356 = vst.msk [vmem:[%s333 + $0x30] sm:$0xff] %vm44, %v323
    %357 = vst.msk [vmem:[%s333 + $0x38] sm:$0xff] %vm44, %v324
    %358 = vst.msk [vmem:[%s333 + $0x40] sm:$0xff] %vm44, %v325
    %359 = vst.msk [vmem:[%s333 + $0x48] sm:$0xff] %vm44, %v326
    %360 = vst.msk [vmem:[%s333 + $0x50] sm:$0xff] %vm44, %v327
    %361 = vst.msk [vmem:[%s333 + $0x58] sm:$0xff] %vm44, %v328
    %362 = vst.msk [vmem:[%s333 + $0x60] sm:$0xff] %vm44, %v329
    %363 = vst.msk [vmem:[%s333 + $0x68] sm:$0xff] %vm44, %v330
    %364 = vst.msk [vmem:[%s333 + $0x70] sm:$0xff] %vm44, %v331
    %365 = vst.msk [vmem:[%s333 + $0x78] sm:$0xff] %vm44, %v332
    // Predicated region
    $region10: #{tpu_custom_call.1} parent=1 // pred_check
      _
    $region11: #{tpu_custom_call.1} parent=1 // pred_check_branch
      %367 = sbr.rel (0) target = $region13
    $region12: #{tpu_custom_call.1} parent=1 // pred_region
      %s369 = ssub.s32 4096, 4096
      %370 = vsyncadd [#allocation3], %s369
      %s371 = sshll.u32 [#allocation2], 4
      %s372 = int_to_ptr.vmem [resolvable:$true] %s371
      %377 = dma.vmem_to_hbm [thread:$0]  %s372, 4096, %s2, [#allocation3], 128, 128, 8
    $region13: #{tpu_custom_call.1} parent=1 // pred_fallthru
      _
    // Predicated region
    $region14: #{tpu_custom_call.1} parent=1 // pred_check
      _
    $region15: #{tpu_custom_call.1} parent=1 // pred_check_branch
      %379 = sbr.rel (0) target = $region17
    $region16: #{tpu_custom_call.1} parent=1 // pred_region
      %380 = dma.done [#allocation3], 4096
    $region17: #{tpu_custom_call.1} parent=1 // pred_fallthru
      _
    %381 = vsyncpa [#allocation3], 1

</llo_original>
